<compile_context>
chip_gen: v7x
topology: tpu7x:2x2x1
jax: 0.10.0
libtpu: 0.0.40
codegen_flags: <defaults>
</compile_context>

<pallas_src>
import functools

import jax
import jax.numpy as jnp
from jax import lax
from jax.experimental import pallas as pl
from jax.experimental.pallas import tpu as pltpu


def _round_up(x, m):
    return ((x + m - 1) // m) * m


# -----------------------------------------------------------------------------
# TPU-generation probing (defensive: fall back to conservative values)
# -----------------------------------------------------------------------------
def _vmem_capacity_bytes():
    try:
        info = pltpu.get_tpu_info()
        for attr in ("vmem_capacity_bytes", "vmem_bytes", "vmem_size_bytes"):
            v = getattr(info, attr, None)
            if v:
                return int(v)
    except Exception:
        pass
    return 64 << 20  # conservative: v7x per-TensorCore VMEM


def _num_tensorcores():
    try:
        info = pltpu.get_tpu_info()
        for attr in ("num_cores", "core_count", "tensorcore_count",
                     "num_tensorcores"):
            v = getattr(info, attr, None)
            if v:
                return int(v)
    except Exception:
        pass
    try:
        kind = jax.devices()[0].device_kind.lower()
        if "v7" in kind:
            return 2
    except Exception:
        pass
    return 1


def _choose_tiles(M, H, V, out_itemsize, budget_bytes, min_m_tiles):
    """Pick (tm, tk).  Prefer large tm (fewer weight re-streams), then large
    tk (fewer accumulator RMW passes), subject to the VMEM budget."""
    bgb_bytes = 2 * 8 * V * 4  # packed bias/gamma/beta, double-buffered

    def usage(tm, tk):
        return (2 * tm * tk * 2          # x tile, double-buffered (bf16)
                + 2 * tk * V * 2         # weight slab, double-buffered (bf16)
                + 2 * tm * V * out_itemsize  # out tile, double-buffered
                + tm * V * 4             # f32 accumulator scratch
                + bgb_bytes)

    M8 = _round_up(max(M, 1), 8)
    tm_cap = min(512, M8)
    if min_m_tiles > 1 and M8 > 8:
        # force >=min_m_tiles row tiles so the parallel axis shards across TCs
        tm_cap = min(tm_cap, _round_up(pl.cdiv(M8, min_m_tiles), 8))
    tm_cands = sorted({tm_cap} | {t for t in (512, 256, 128, 64, 32, 16, 8)
                                  if t <= tm_cap}, reverse=True)
    tk_cands = [H] + [t for t in (2048, 1024, 512, 256, 128)
                      if t < H and H % t == 0]

    for tm in tm_cands:
        for tk in tk_cands:
            if usage(tm, tk) <= budget_bytes:
                return tm, tk, usage(tm, tk)
    tm, tk = tm_cands[-1], tk_cands[-1]
    return tm, tk, usage(tm, tk)


# -----------------------------------------------------------------------------
# Pallas kernel: fused  Linear(H->V)  +  LayerNorm(V)
#   grid = (M tiles, K(=H) tiles);  f32 accumulator scratch per M tile
# -----------------------------------------------------------------------------
def _proj_layernorm_kernel(x_ref, w_ref, bgb_ref, o_ref, acc_ref, *, eps):
    # x_ref:   [TM, TK]  bf16 tile of flattened hidden states
    # w_ref:   [TK, V]   bf16 tile of projection weight (transposed vs PyTorch)
    # bgb_ref: [8,  V]   f32; row 0 = proj bias, row 1 = LN gamma, row 2 = LN beta
    # o_ref:   [TM, V]   output tile (resident across the K axis)
    # acc_ref: [TM, V]   f32 accumulator scratch
    k = pl.program_id(1)

    @pl.when(k == 0)
    def _():
        acc_ref[...] = jnp.zeros_like(acc_ref)

    # bf16 x bf16 -> f32 accumulate on the MXU.
    acc_ref[...] += jnp.dot(x_ref[...], w_ref[...],
                            preferred_element_type=jnp.float32)

    @pl.when(k == pl.num_programs(1) - 1)
    def _():
        bias = bgb_ref[0:1, :]
        gamma = bgb_ref[1:2, :]
        beta = bgb_ref[2:3, :]
        # bias + LayerNorm over the vocab (lane) axis, all in f32.
        y = acc_ref[...] + bias
        mean = jnp.mean(y, axis=-1, keepdims=True)
        y = y - mean
        var = jnp.mean(y * y, axis=-1, keepdims=True)
        norm = y * lax.rsqrt(var + eps)
        o_ref[...] = (norm * gamma + beta).astype(o_ref.dtype)


def proj_layernorm(hidden, w, b, gamma, beta, *, eps=1e-5,
                   out_dtype=jnp.float32):
    """hidden: [M, H], w: [H, V] (bf16 preferred), b/gamma/beta: [V].
    Returns [M, V] in out_dtype (bf16 allowed when the consumer tolerates it)."""
    M, H = hidden.shape
    H_w, V = w.shape
    assert H == H_w

    # bf16 MXU fast path; LayerNorm / accumulation stay in f32.  The weight is
    # expected to already be bf16 (cast once at init) -- avoid a per-call
    # HBM round-trip convert of [H, V].
    x = hidden if hidden.dtype == jnp.bfloat16 else hidden.astype(jnp.bfloat16)
    w_bf = w if w.dtype == jnp.bfloat16 else w.astype(jnp.bfloat16)

    # Pack bias / gamma / beta into a single sublane-padded (8, V) operand:
    # one BlockSpec, one DMA instead of three.
    bgb = jnp.zeros((8, V), jnp.float32)
    bgb = bgb.at[0].set(b.astype(jnp.float32))
    bgb = bgb.at[1].set(gamma.astype(jnp.float32))
    bgb = bgb.at[2].set(beta.astype(jnp.float32))

    out_itemsize = jnp.dtype(out_dtype).itemsize

    # Per-generation VMEM budgeting.
    vmem_cap = _vmem_capacity_bytes()
    n_cores = _num_tensorcores()
    budget = int(vmem_cap * 0.75)
    tm, tk, use_bytes = _choose_tiles(M, H, V, out_itemsize, budget, n_cores)

    # Pad M so the grid divides exactly; padded rows compute LayerNorm of the
    # bias vector (eps-protected) and are sliced off afterwards.
    M_pad = _round_up(M, tm)
    if M_pad != M:
        x = jnp.pad(x, ((0, M_pad - M), (0, 0)))
    n_k = H // tk
    m_tiles = M_pad // tm

    # vmem limit: enough headroom over the resident set, never above ~85% of
    # the physical per-TC capacity (v7x has only 64 MiB).
    vmem_limit = min(max(int(use_bytes * 1.25) + (4 << 20), 16 << 20),
                     int(vmem_cap * 0.85))

    kernel = functools.partial(_proj_layernorm_kernel, eps=eps)

    cost = pl.CostEstimate(
        flops=int(2 * M_pad * H * V),
        transcendentals=int(M_pad),
        bytes_accessed=int(M_pad * H * 2            # x read (bf16)
                           + m_tiles * H * V * 2    # weight streamed per M tile
                           + M_pad * V * out_itemsize  # output writeback
                           + 8 * V * 4),            # packed bias/gamma/beta
    )

    # TODO(synk): for very large vocab V (>~16K) on v7x, add a V grid axis
    # with a two-pass LayerNorm (sum / sumsq scratch) instead of keeping the
    # full-V accumulator resident; current sizing auto-shrinks tm instead.
    out = pl.pallas_call(
        kernel,
        out_shape=jax.ShapeDtypeStruct((M_pad, V), out_dtype),
        grid_spec=pltpu.PrefetchScalarGridSpec(
            num_scalar_prefetch=0,
            grid=(m_tiles, n_k),
            in_specs=[
                pl.BlockSpec((tm, tk), lambda i, k: (i, k)),   # hidden rows
                pl.BlockSpec((tk, V), lambda i, k: (k, 0)),    # weight slab
                pl.BlockSpec((8, V), lambda i, k: (0, 0)),     # bias/gamma/beta
            ],
            out_specs=pl.BlockSpec((tm, V), lambda i, k: (i, 0)),
            scratch_shapes=[pltpu.VMEM((tm, V), jnp.float32)],
        ),
        compiler_params=pltpu.CompilerParams(
            dimension_semantics=("parallel", "arbitrary"),
            vmem_limit_bytes=int(vmem_limit)),
        cost_estimate=cost,
    )(x, w_bf, bgb)

    return out[:M] if M_pad != M else out


# -----------------------------------------------------------------------------
# Deterministic stand-in for the (pretrained, frozen) Llama backbone.
# TODO(synk): the real pretrained Llama checkpoint cannot be reproduced
# in-script; this single-layer Llama-style block is a deterministic stand-in
# that produces the `last_hidden_state` consumed by the Pallas hot path.
# -----------------------------------------------------------------------------
def llama_standin_hidden(params, input_ids, attention_mask):
    """Returns last_hidden_state of shape [B, S, H]."""
    B, S = input_ids.shape
    H = params["embed"].shape[1]

    h = params["embed"][input_ids]  # [B, S, H] embedding lookup

    def rmsnorm(x, scale):
        ms = jnp.mean(x * x, axis=-1, keepdims=True)
        return x * lax.rsqrt(ms + 1e-6) * scale

    x = rmsnorm(h, params["ln1"])
    q = x @ params["wq"]
    k = x @ params["wk"]
    v = x @ params["wv"]
    scores = jnp.einsum("bqh,bkh->bqk", q, k) / jnp.sqrt(jnp.float32(H))

    # causal mask + padding attention_mask (additive, like HF Llama)
    causal = jnp.tril(jnp.ones((S, S), dtype=jnp.bool_))
    pad = attention_mask[:, None, :].astype(jnp.bool_)        # [B, 1, S]
    mask = jnp.logical_and(causal[None, :, :], pad)
    scores = jnp.where(mask, scores, jnp.float32(-1e9))
    attn = jax.nn.softmax(scores, axis=-1)
    h = h + jnp.einsum("bqk,bkh->bqh", attn, v) @ params["wo"]

    # MLP (SwiGLU-style)
    x = rmsnorm(h, params["ln2"])
    gate = jax.nn.silu(x @ params["w_gate"])
    up = x @ params["w_up"]
    h = h + (gate * up) @ params["w_down"]
    return h


# -----------------------------------------------------------------------------
# Full model forward (stand-in backbone + Pallas projection/LayerNorm kernel)
# -----------------------------------------------------------------------------
def text_to_audio_forward(params, input_ids, attention_mask):
    B, S = input_ids.shape
    V = params["proj_w"].shape[1]

    last_hidden = llama_standin_hidden(params, input_ids, attention_mask)  # [B,S,H]
    # One bf16 cast here feeds the kernel directly (the big weight is already
    # bf16 in params, so no per-call weight convert).
    flat = last_hidden.reshape(B * S, -1).astype(jnp.bfloat16)

    out_flat = proj_layernorm(
        flat,
        params["proj_w"], params["proj_b"],
        params["ln_gamma"], params["ln_beta"],
        eps=1e-5,
        out_dtype=jnp.float32,   # match PyTorch nn.LayerNorm output dtype
    )
    return out_flat.reshape(B, S, V)


# -----------------------------------------------------------------------------
# Deterministic parameter construction
# -----------------------------------------------------------------------------
def init_params(key, *, text_vocab, hidden, wav_vocab, ffn):
    ks = jax.random.split(key, 10)
    s = 0.02
    return {
        "embed":   s * jax.random.normal(ks[0], (text_vocab, hidden), jnp.float32),
        "wq":      s * jax.random.normal(ks[1], (hidden, hidden), jnp.float32),
        "wk":      s * jax.random.normal(ks[2], (hidden, hidden), jnp.float32),
        "wv":      s * jax.random.normal(ks[3], (hidden, hidden), jnp.float32),
        "wo":      s * jax.random.normal(ks[4], (hidden, hidden), jnp.float32),
        "w_gate":  s * jax.random.normal(ks[5], (hidden, ffn), jnp.float32),
        "w_up":    s * jax.random.normal(ks[6], (hidden, ffn), jnp.float32),
        "w_down":  s * jax.random.normal(ks[7], (ffn, hidden), jnp.float32),
        "ln1":     jnp.ones((hidden,), jnp.float32),
        "ln2":     jnp.ones((hidden,), jnp.float32),
        # projection: stored as [H, V] == PyTorch nn.Linear weight [V, H]
        # transposed, and cast ONCE to bf16 (MXU operand dtype) at init.
        "proj_w":  (s * jax.random.normal(ks[8], (hidden, wav_vocab), jnp.float32)
                    ).astype(jnp.bfloat16),
        "proj_b":  s * jax.random.normal(ks[9], (wav_vocab,), jnp.float32),
        # nn.LayerNorm default init: weight=1, bias=0
        "ln_gamma": jnp.ones((wav_vocab,), jnp.float32),
        "ln_beta":  jnp.zeros((wav_vocab,), jnp.float32),
    }


if __name__ == "__main__":
    # Small shapes consistent with the module's forward:
    # input_ids / attention_mask: [B, S]; hidden H; wav-tokenizer vocab V.
    B, S, H, V = 2, 8, 32, 256
    TEXT_VOCAB, FFN = 100, 64

    key = jax.random.PRNGKey(0)
    k_par, k_ids, k_len = jax.random.split(key, 3)

    params = init_params(k_par, text_vocab=TEXT_VOCAB, hidden=H,
                         wav_vocab=V, ffn=FFN)

    input_ids = jax.random.randint(k_ids, (B, S), 0, TEXT_VOCAB, dtype=jnp.int32)
    # attention_mask: 1 for real tokens, 0 for padding (pad the tail of row 1)
    attention_mask = jnp.ones((B, S), jnp.int32).at[1, 6:].set(0)

    out = jax.jit(text_to_audio_forward)(params, input_ids, attention_mask)
    out = jax.block_until_ready(out)
    assert out.shape == (B, S, V) and out.dtype == jnp.float32

    # Cross-check the Pallas hot path against a pure-JAX reference that uses
    # the same bf16-operand / f32-accumulate matmul, with LayerNorm in f32.
    hid = llama_standin_hidden(params, input_ids, attention_mask).reshape(B * S, H)
    ref = jnp.dot(hid.astype(jnp.bfloat16), params["proj_w"],
                  preferred_element_type=jnp.float32) + params["proj_b"]
    mu = ref.mean(-1, keepdims=True)
    var = ((ref - mu) ** 2).mean(-1, keepdims=True)
    ref = (ref - mu) / jnp.sqrt(var + 1e-5) * params["ln_gamma"] + params["ln_beta"]
    assert jnp.allclose(out.reshape(B * S, V), ref, atol=5e-3, rtol=5e-3)

    print("KERNEL_OK")
</pallas_src>

<mosaic_0001>
module attributes {stable_mosaic.version = 11 : i64} {
  func.func @_proj_layernorm_kernel(%arg0: i32, %arg1: i32, %arg2: memref<16x32xbf16, #tpu.memory_space<vmem>>, %arg3: memref<32x256xbf16, #tpu.memory_space<vmem>>, %arg4: memref<8x256xf32, #tpu.memory_space<vmem>>, %arg5: memref<16x256xf32, #tpu.memory_space<vmem>>, %arg6: memref<16x256xf32, #tpu.memory_space<vmem>>) attributes {dimension_semantics = [#tpu.dimension_semantics<parallel>, #tpu.dimension_semantics<arbitrary>], iteration_bounds = array<i64: 1, 1>, scalar_prefetch = 0 : i64, scratch_operands = 1 : i64, tpu.core_type = #tpu.core_type<tc>, window_params = [{transform_indices = @transform_0, window_bounds = array<i64: 16, 32>}, {transform_indices = @transform_1, window_bounds = array<i64: 32, 256>}, {pipeline_mode = #tpu.pipeline_mode<synchronous>, transform_indices = @transform_2, window_bounds = array<i64: 8, 256>}, {transform_indices = @transform_3, window_bounds = array<i64: 16, 256>}]} {
    %c0_i32 = arith.constant 0 : i32
    %0 = arith.cmpi eq, %arg1, %c0_i32 : i32
    %1 = arith.extui %0 : i1 to i32
    %c0_i32_0 = arith.constant 0 : i32
    %2 = arith.cmpi ne, %1, %c0_i32_0 : i32
    scf.if %2 {
      %cst_10 = arith.constant 0.000000e+00 : f32
      %12 = vector.broadcast %cst_10 : f32 to vector<16x256xf32>
      %c0_11 = arith.constant 0 : index
      %c0_12 = arith.constant 0 : index
      %13 = vector.load %arg6[%c0_11, %c0_12] : memref<16x256xf32, #tpu.memory_space<vmem>>, vector<16x256xf32>
      tpu.vector_store %arg6[%c0_11, %c0_12], %12 {strides = array<i32>} : memref<16x256xf32, #tpu.memory_space<vmem>>, vector<16x256xf32>,
    } else {
    }
    %c0 = arith.constant 0 : index
    %c0_1 = arith.constant 0 : index
    %3 = vector.load %arg6[%c0, %c0_1] : memref<16x256xf32, #tpu.memory_space<vmem>>, vector<16x256xf32>
    %c0_2 = arith.constant 0 : index
    %c0_3 = arith.constant 0 : index
    %4 = vector.load %arg2[%c0_2, %c0_3] : memref<16x32xbf16, #tpu.memory_space<vmem>>, vector<16x32xbf16>
    %c0_4 = arith.constant 0 : index
    %c0_5 = arith.constant 0 : index
    %5 = vector.load %arg3[%c0_4, %c0_5] : memref<32x256xbf16, #tpu.memory_space<vmem>>, vector<32x256xbf16>
    %cst = arith.constant dense<0.000000e+00> : vector<16x256xf32>
    %6 = tpu.matmul %4, %5, %cst {dimension_numbers = #tpu.dot_dimension_numbers<[1], [0], [0], [1], [0, 0, 1, 1], [], []>} : vector<16x32xbf16>, vector<32x256xbf16>, vector<16x256xf32> -> vector<16x256xf32>
    %7 = arith.addf %3, %6 : vector<16x256xf32>
    %c0_6 = arith.constant 0 : index
    %c0_7 = arith.constant 0 : index
    %8 = vector.load %arg6[%c0_6, %c0_7] : memref<16x256xf32, #tpu.memory_space<vmem>>, vector<16x256xf32>
    tpu.vector_store %arg6[%c0_6, %c0_7], %7 {strides = array<i32>} : memref<16x256xf32, #tpu.memory_space<vmem>>, vector<16x256xf32>,
    %c0_i32_8 = arith.constant 0 : i32
    %9 = arith.cmpi eq, %arg1, %c0_i32_8 : i32
    %10 = arith.extui %9 : i1 to i32
    %c0_i32_9 = arith.constant 0 : i32
    %11 = arith.cmpi ne, %10, %c0_i32_9 : i32
    scf.if %11 {
      %c0_10 = arith.constant 0 : index
      %c0_11 = arith.constant 0 : index
      %12 = vector.load %arg4[%c0_10, %c0_11] : memref<8x256xf32, #tpu.memory_space<vmem>>, vector<1x256xf32>
      %c1 = arith.constant 1 : index
      %c0_12 = arith.constant 0 : index
      %13 = vector.load %arg4[%c1, %c0_12] : memref<8x256xf32, #tpu.memory_space<vmem>>, vector<1x256xf32>
      %c2 = arith.constant 2 : index
      %c0_13 = arith.constant 0 : index
      %14 = vector.load %arg4[%c2, %c0_13] : memref<8x256xf32, #tpu.memory_space<vmem>>, vector<1x256xf32>
      %c0_14 = arith.constant 0 : index
      %c0_15 = arith.constant 0 : index
      %15 = vector.load %arg6[%c0_14, %c0_15] : memref<16x256xf32, #tpu.memory_space<vmem>>, vector<16x256xf32>
      %16 = vector.broadcast %12 : vector<1x256xf32> to vector<16x256xf32>
      %17 = arith.addf %15, %16 : vector<16x256xf32>
      %cst_16 = arith.constant dense<0.000000e+00> : vector<16xf32>
      %18 = vector.multi_reduction <add>, %17, %cst_16 [1] : vector<16x256xf32> to vector<16xf32>
      %19 = vector.shape_cast %18 : vector<16xf32> to vector<16x1xf32>
      %cst_17 = arith.constant 2.560000e+02 : f32
      %20 = vector.broadcast %cst_17 : f32 to vector<16x1xf32>
      %21 = arith.divf %19, %20 : vector<16x1xf32>
      %22 = vector.broadcast %21 : vector<16x1xf32> to vector<16x256xf32>
      %23 = arith.subf %17, %22 : vector<16x256xf32>
      %24 = arith.mulf %23, %23 : vector<16x256xf32>
      %cst_18 = arith.constant dense<0.000000e+00> : vector<16xf32>
      %25 = vector.multi_reduction <add>, %24, %cst_18 [1] : vector<16x256xf32> to vector<16xf32>
      %26 = vector.shape_cast %25 : vector<16xf32> to vector<16x1xf32>
      %cst_19 = arith.constant 2.560000e+02 : f32
      %27 = vector.broadcast %cst_19 : f32 to vector<16x1xf32>
      %28 = arith.divf %26, %27 : vector<16x1xf32>
      %cst_20 = arith.constant 9.99999974E-6 : f32
      %29 = vector.broadcast %cst_20 : f32 to vector<16x1xf32>
      %30 = arith.addf %28, %29 : vector<16x1xf32>
      %31 = math.rsqrt %30 : vector<16x1xf32>
      %32 = vector.broadcast %31 : vector<16x1xf32> to vector<16x256xf32>
      %33 = arith.mulf %23, %32 : vector<16x256xf32>
      %34 = vector.broadcast %13 : vector<1x256xf32> to vector<16x256xf32>
      %35 = arith.mulf %33, %34 : vector<16x256xf32>
      %36 = vector.broadcast %14 : vector<1x256xf32> to vector<16x256xf32>
      %37 = arith.addf %35, %36 : vector<16x256xf32>
      %c0_21 = arith.constant 0 : index
      %c0_22 = arith.constant 0 : index
      %38 = vector.load %arg5[%c0_21, %c0_22] : memref<16x256xf32, #tpu.memory_space<vmem>>, vector<16x256xf32>
      tpu.vector_store %arg5[%c0_21, %c0_22], %37 {strides = array<i32>} : memref<16x256xf32, #tpu.memory_space<vmem>>, vector<16x256xf32>,
    } else {
    }
    return
  }
  func.func @transform_0(%arg0: i32, %arg1: i32) -> (i32, i32) {
    %c0_i32 = arith.constant 0 : i32
    return %arg0, %arg1 : i32, i32
  }
  func.func @transform_1(%arg0: i32, %arg1: i32) -> (i32, i32) {
    %c0_i32 = arith.constant 0 : i32
    %c0_i32_0 = arith.constant 0 : i32
    return %arg1, %c0_i32 : i32, i32
  }
  func.func @transform_2(%arg0: i32, %arg1: i32) -> (i32, i32) {
    %c0_i32 = arith.constant 0 : i32
    %c0_i32_0 = arith.constant 0 : i32
    %c0_i32_1 = arith.constant 0 : i32
    return %c0_i32, %c0_i32_0 : i32, i32
  }
  func.func @transform_3(%arg0: i32, %arg1: i32) -> (i32, i32) {
    %c0_i32 = arith.constant 0 : i32
    %c0_i32_0 = arith.constant 0 : i32
    return %arg0, %c0_i32 : i32, i32
  }
}

</mosaic_0001>

<llo_original>
// kernel: text_to_audio_forward.1
$region0: #{text_to_audio_forward.1}
  #allocation0 [shape = 'u32[]', space=smem, size = 0x4, offset = 0x4, fixed_abs, tag = 'smem constant byte address 0x4 - core index']
  #allocation1 [shape = 'u32[144,128]{1,0:T(1,128)}', space=vmem, size = 0x12000, scoped, tag = 'internal scratch']
  #allocation2 [shape = 'f32[16,256]{1,0:T(8,128)}', space=vmem, size = 0x4000, scoped, tag = 'scratch operand']
  %s0 = inlined_call_operand.vmem [shape: bf16[16,32], index: 0, kind: input, shape index: {}]
  %s1 = inlined_call_operand.vmem [shape: bf16[32,256], index: 1, kind: input, shape index: {}]
  %s2 = inlined_call_operand.vmem [shape: f32[8,256], index: 2, kind: input, shape index: {}]
  %s3 = inlined_call_operand.hbm [shape: f32[16,256], index: 3, kind: output, shape index: {}]
  %s4 = sld [smem:[#allocation0]]
  $region30: #{text_to_audio_forward.1} parent=0
    _
  %s6 = ssub.s32 1, %s4
  %s7 = scalar_select 0, %s6, %s4
  $region1: #{text_to_audio_forward.1} parent=0
    #allocation3 [shape = 'u8[16384]{0}', space=vmem, size = 0x4000, scoped, tag = 'output window, operand 0, single buffered']
    #allocation4 [shape = 's32[1]{0}', space=sflag, size = 0x4, scoped, tag = 'scoped memory for text_to_audio_forward.1']
    %8 = vsyncpa [#allocation4], 0
    // Predicated region
    $region2: #{text_to_audio_forward.1} parent=1 // pred_check
      _
    $region3: #{text_to_audio_forward.1} parent=1 // pred_check_branch
      %10 = sbr.rel (0) target = $region5
    $region4: #{text_to_audio_forward.1} parent=1 // pred_region
      _
    $region5: #{text_to_audio_forward.1} parent=1 // pred_fallthru
      _
    // Predicated region
    $region6: #{text_to_audio_forward.1} parent=1 // pred_check
      _
    $region7: #{text_to_audio_forward.1} parent=1 // pred_check_branch
      %12 = sbr.rel (0) target = $region9
    $region8: #{text_to_audio_forward.1} parent=1 // pred_region
      _
    $region9: #{text_to_audio_forward.1} parent=1 // pred_fallthru
      _
    // Predicated region
    $region10: #{text_to_audio_forward.1} parent=1 // pred_check
      _
    $region11: #{text_to_audio_forward.1} parent=1 // pred_check_branch
      %14 = sbr.rel (0) target = $region13
    $region12: #{text_to_audio_forward.1} parent=1 // pred_region
      _
    $region13: #{text_to_audio_forward.1} parent=1 // pred_fallthru
      _
    %p16 = scmp.eq.s32.totalorder 0, 0
    // Predicated region
    $region14: #{text_to_audio_forward.1} parent=1 // pred_check
      %p17 = pneg %p16
    $region15: #{text_to_audio_forward.1} parent=1 // pred_check_branch
      %19 = sbr.rel (%p17) target = $region17
    $region16: #{text_to_audio_forward.1} parent=1 // pred_region
      %20 = vst [vmem:[#allocation2] sm:$0xff] 0.0
      %21 = vst [vmem:[#allocation2 + $0x8] sm:$0xff] 0.0
      %22 = vst [vmem:[#allocation2 + $0x10] sm:$0xff] 0.0
      %23 = vst [vmem:[#allocation2 + $0x18] sm:$0xff] 0.0
    $region17: #{text_to_audio_forward.1} parent=1 // pred_fallthru
      _
    %v24 = vld [vmem:[#allocation2] sm:$0xff]
    %v25 = vld [vmem:[#allocation2 + $0x8] sm:$0xff]
    %v26 = vld [vmem:[#allocation2 + $0x10] sm:$0xff]
    %v27 = vld [vmem:[#allocation2 + $0x18] sm:$0xff]
    %v28 = vld [vmem:[%s0] sm:$0xf]
    %v29 = vld [vmem:[%s0 + $0x4] sm:$0xf]
    %v30 = vld [vmem:[%s1] sm:$0xff]
    %v31 = vld [vmem:[%s1 + $0x8] sm:$0xff]
    %v32 = vld [vmem:[%s1 + $0x10] sm:$0xff]
    %v33 = vld [vmem:[%s1 + $0x18] sm:$0xff]
    %v36 = vunpack.c.l.b16 %v28
    %v37 = vunpack.c.l.b16 %v29
    %v38 = vpack.c.b16 %v37, %v36
    %v43 = vunpack.c.l.b16 %v30
    %v44 = vunpack.c.h.b16 %v30
    %v45 = vunpack.c.l.b16 %v31
    %v46 = vunpack.c.h.b16 %v31
    %v47 = vunpack.c.l.b16 %v32
    %v48 = vunpack.c.h.b16 %v32
    %v49 = vunpack.c.l.b16 %v33
    %v50 = vunpack.c.h.b16 %v33
    %v51 = vpack.c.b16 %v45, %v43
    %v52 = vpack.c.b16 %v46, %v44
    %v53 = vpack.c.b16 %v49, %v47
    %v54 = vpack.c.b16 %v50, %v48
    %vm59 = vcmask 261120
    %v61 = vsel %vm59, %v38, 0
    %63 = vmatprep.subr.bf16.mxu0 %v52
    %64 = vmatpush1.bf16.msra.mxu0 %v51
    %65 = vmatprep.subr.bf16.mxu0 %v54
    %66 = vmatpush1.bf16.msra.mxu0 %v53
    %67 = vmatprep.subr.bf16.mxu0 0
    %68 = vmatpush1.bf16.msra.mxu0 0
    %69 = vmatprep.subr.bf16.mxu0 0
    %70 = vmatpush1.bf16.msra.mxu0 0
    %71 = vmatprep.subr.bf16.mxu0 0
    %72 = vmatpush1.bf16.msra.mxu0 0
    %73 = vmatprep.subr.bf16.mxu0 0
    %74 = vmatpush1.bf16.msra.mxu0 0
    %75 = vmatprep.subr.bf16.mxu0 0
    %76 = vmatpush1.bf16.msra.mxu0 0
    %77 = vmatprep.subr.bf16.mxu0 0
    %78 = vmatpush1.bf16.msra.mxu0 0
    %79 = vmatprep.subr.bf16.mxu0 0
    %80 = vmatpush1.bf16.msra.mxu0 0
    %81 = vmatprep.subr.bf16.mxu0 0
    %82 = vmatpush1.bf16.msra.mxu0 0
    %83 = vmatprep.subr.bf16.mxu0 0
    %84 = vmatpush1.bf16.msra.mxu0 0
    %85 = vmatprep.subr.bf16.mxu0 0
    %86 = vmatpush1.bf16.msra.mxu0 0
    %87 = vmatprep.subr.bf16.mxu0 0
    %88 = vmatpush1.bf16.msra.mxu0 0
    %89 = vmatprep.subr.bf16.mxu0 0
    %90 = vmatpush1.bf16.msra.mxu0 0
    %91 = vmatprep.subr.bf16.mxu0 0
    %92 = vmatpush1.bf16.msra.mxu0 0
    %93 = vmatprep.subr.bf16.mxu0 0
    %94 = vmatpush1.bf16.msra.mxu0 0
    %95 = vmatprep.mubr.bf16.mxu0 0
    %96 = vmatmul.mubr.bf16.gmra.mrb[0].mxu0 %v61
    %v97 = vpop.f32.mrb[0].mxu0
    %v98 = vadd.f32 0.0, %v97
    %v99 = vpop.f32.mrb[0].mxu0
    %v100 = vadd.f32 0.0, %v99
    %v101 = vpop.f32.mrb[0].mxu0
    %v102 = vadd.f32 0.0, %v101
    %v103 = vpop.f32.mrb[0].mxu0
    %v104 = vadd.f32 0.0, %v103
    %105 = vdwg.mxu0
    %v106 = vadd.f32 %v24, %v98
    %v107 = vadd.f32 %v25, %v100
    %v108 = vadd.f32 %v26, %v102
    %v109 = vadd.f32 %v27, %v104
    %110 = vst [vmem:[#allocation2] sm:$0xff] %v106
    %111 = vst [vmem:[#allocation2 + $0x8] sm:$0xff] %v107
    %112 = vst [vmem:[#allocation2 + $0x10] sm:$0xff] %v108
    %113 = vst [vmem:[#allocation2 + $0x18] sm:$0xff] %v109
    // Predicated region
    $region18: #{text_to_audio_forward.1} parent=1 // pred_check
      %p114 = pneg %p16
    $region19: #{text_to_audio_forward.1} parent=1 // pred_check_branch
      %116 = sbr.rel (%p114) target = $region21
    $region20: #{text_to_audio_forward.1} parent=1 // pred_region
      %v117 = vld [vmem:[%s2] ss:$8 sm:$0x3]
      %s118 = scalar_lea.vmem %s2, 1
      %v119 = vld [vmem:[%s118] ss:$8 sm:$0x3]
      %s120 = scalar_lea.vmem %s2, 2
      %v121 = vld [vmem:[%s120] ss:$8 sm:$0x3]
      %v122 = vld [vmem:[#allocation2] sm:$0xff]
      %v123 = vld [vmem:[#allocation2 + $0x8] sm:$0xff]
      %v124 = vld [vmem:[#allocation2 + $0x10] sm:$0xff]
      %v125 = vld [vmem:[#allocation2 + $0x18] sm:$0xff]
      %v127 = vlaneseq
      %v128 = vshrl.u32 %v127, 7
      %v129 = vsub.s32 0, %v128
      %v130 = vrot.slane %v117, %v129
      %v131 = vlaneseq
      %v132 = vshrl.u32 %v131, 7
      %v133 = vsub.s32 1, %v132
      %v134 = vrot.slane %v117, %v133
      %v137 = vadd.f32 %v122, %v130
      %v138 = vadd.f32 %v123, %v134
      %v139 = vadd.f32 %v124, %v130
      %v140 = vadd.f32 %v125, %v134
      %v141 = vadd.f32 %v137, %v138
      %142 = vadd.xlane.f32.xlu0 %v141
      %v143 = vpop.xlane.xlu0 %142
      %v144 = vadd.f32 %v139, %v140
      %145 = vadd.xlane.f32.xlu0 %v144
      %v146 = vpop.xlane.xlu0 %145
      %v147 = vrcp.pop 256.0
      %v148 = vmul.f32 %v143, %v147
      %v149 = vmul.f32 %v146, %v147
      %v150 = vsub.f32 %v137, %v148
      %v151 = vsub.f32 %v138, %v148
      %v152 = vsub.f32 %v139, %v149
      %v153 = vsub.f32 %v140, %v149
      %v154 = vmul.f32 %v150, %v150
      %v155 = vmul.f32 %v151, %v151
      %v156 = vmul.f32 %v152, %v152
      %v157 = vmul.f32 %v153, %v153
      %v158 = vadd.f32 %v154, %v155
      %159 = vadd.xlane.f32.xlu0 %v158
      %v160 = vpop.xlane.xlu0 %159
      %v161 = vadd.f32 %v156, %v157
      %162 = vadd.xlane.f32.xlu0 %v161
      %v163 = vpop.xlane.xlu0 %162
      %v164 = vmul.f32 %v160, %v147
      %v165 = vmul.f32 %v163, %v147
      %v166 = vadd.f32 %v164, 1e-05
      %v167 = vadd.f32 %v165, 1e-05
      %v168 = vrsqrt.pop %v166
      %v169 = vrsqrt.pop %v167
      %v170 = vmul.f32 %v150, %v168
      %v171 = vmul.f32 %v151, %v168
      %v172 = vmul.f32 %v152, %v169
      %v173 = vmul.f32 %v153, %v169
      %v175 = vlaneseq
      %v176 = vshrl.u32 %v175, 7
      %v177 = vsub.s32 0, %v176
      %v178 = vrot.slane %v119, %v177
      %v179 = vlaneseq
      %v180 = vshrl.u32 %v179, 7
      %v181 = vsub.s32 1, %v180
      %v182 = vrot.slane %v119, %v181
      %v185 = vmul.f32 %v170, %v178
      %v186 = vmul.f32 %v171, %v182
      %v187 = vmul.f32 %v172, %v178
      %v188 = vmul.f32 %v173, %v182
      %v190 = vlaneseq
      %v191 = vshrl.u32 %v190, 7
      %v192 = vsub.s32 0, %v191
      %v193 = vrot.slane %v121, %v192
      %v194 = vlaneseq
      %v195 = vshrl.u32 %v194, 7
      %v196 = vsub.s32 1, %v195
      %v197 = vrot.slane %v121, %v196
      %v200 = vadd.f32 %v185, %v193
      %v201 = vadd.f32 %v186, %v197
      %v202 = vadd.f32 %v187, %v193
      %v203 = vadd.f32 %v188, %v197
      %204 = vst [vmem:[#allocation3] sm:$0xff] %v200
      %205 = vst [vmem:[#allocation3 + $0x8] sm:$0xff] %v201
      %206 = vst [vmem:[#allocation3 + $0x10] sm:$0xff] %v202
      %207 = vst [vmem:[#allocation3 + $0x18] sm:$0xff] %v203
    $region21: #{text_to_audio_forward.1} parent=1 // pred_fallthru
      _
    // Predicated region
    $region22: #{text_to_audio_forward.1} parent=1 // pred_check
      _
    $region23: #{text_to_audio_forward.1} parent=1 // pred_check_branch
      %209 = sbr.rel (0) target = $region25
    $region24: #{text_to_audio_forward.1} parent=1 // pred_region
      %s211 = ssub.s32 512, 512
      %212 = vsyncadd [#allocation4], %s211
      %s213 = sshll.u32 [#allocation3], 4
      %s214 = int_to_ptr.vmem [resolvable:$true] %s213
      %219 = dma.vmem_to_hbm [thread:$0]  %s214, 512, %s3, [#allocation4], 256, 256, 16
    $region25: #{text_to_audio_forward.1} parent=1 // pred_fallthru
      _
    // Predicated region
    $region26: #{text_to_audio_forward.1} parent=1 // pred_check
      _
    $region27: #{text_to_audio_forward.1} parent=1 // pred_check_branch
      %221 = sbr.rel (0) target = $region29
    $region28: #{text_to_audio_forward.1} parent=1 // pred_region
      %222 = dma.done [#allocation4], 512
    $region29: #{text_to_audio_forward.1} parent=1 // pred_fallthru
      _
    %223 = vsyncpa [#allocation4], 1

</llo_original>
